<compile_context>
chip_gen: v7x
topology: tpu7x:2x2x1
jax: 0.10.0
libtpu: 0.0.40
codegen_flags: <defaults>
</compile_context>

<pallas_src>
import functools

import jax
import jax.numpy as jnp
from jax import lax
from jax.experimental import pallas as pl
from jax.experimental.pallas import tpu as pltpu


def _round_up(x, m):
    return (x + m - 1) // m * m


# --------------------------------------------------------------------------- #
# Kernel
# --------------------------------------------------------------------------- #
def textrnn_kernel(x_ref, h0_ref, wih_ref, whh_ref, bias_ref, wfc_ref, bfc_ref,
                   out_ref, xw_ref, *, seq_len, unroll):
    """One batch tile: full RNN recurrence + final linear layer.

    x_ref    : [seq, TB, C_pad]   time-major input tile (zero padded)
    h0_ref   : [TB, H_pad]        initial hidden state
    wih_ref  : [C_pad, H_pad]     W_ih^T (zero padded, resident)
    whh_ref  : [H_pad, H_pad]     W_hh^T (zero padded, resident)
    bias_ref : [1, H_pad]         b_ih + b_hh (fused, zero padded)
    wfc_ref  : [H_pad, C_pad]     W_fc^T (zero padded, resident)
    bfc_ref  : [1, C_pad]         fc bias (zero padded)
    out_ref  : [TB, C_pad]        logits (lane-dense store)
    xw_ref   : [seq, TB, H_pad]   VMEM scratch for the hoisted input projection
    """
    # ---- Hoisted input projection (off the serial h->h chain), written into a
    # VMEM scratch per timestep so its live range stays one tile, not seq tiles.
    @pl.loop(0, seq_len, unroll=unroll)
    def _project(t):
        xw_ref[t] = (jnp.dot(x_ref[t], wih_ref[...],
                             preferred_element_type=jnp.float32)
                     + bias_ref[...])

    # ---- Serial recurrence: one MXU dot + tanh per step, nothing else.
    def step(t, h):
        return jnp.tanh(xw_ref[t]
                        + jnp.dot(h, whh_ref[...],
                                  preferred_element_type=jnp.float32))

    h = lax.fori_loop(0, seq_len, step, h0_ref[...].astype(jnp.float32),
                      unroll=unroll)

    # ---- Final linear layer, lane-dense store.
    out_ref[...] = (jnp.dot(h, wfc_ref[...], preferred_element_type=jnp.float32)
                    + bfc_ref[...]).astype(out_ref.dtype)


# --------------------------------------------------------------------------- #
# Parameter padding (done ONCE at parameter-load time, not per forward call)
# --------------------------------------------------------------------------- #
def pad_textrnn_params(params, *, n_class, n_hidden):
    w_ih, w_hh, b_ih, b_hh, w_fc, b_fc = params
    f32 = jnp.float32
    c_pad = _round_up(max(n_class, 128), 128)    # lanes (lane-dense output)
    h_pad = _round_up(max(n_hidden, 128), 128)   # lanes

    wih_p = jnp.zeros((c_pad, h_pad), f32).at[:n_class, :n_hidden].set(
        w_ih.T.astype(f32))
    whh_p = jnp.zeros((h_pad, h_pad), f32).at[:n_hidden, :n_hidden].set(
        w_hh.T.astype(f32))
    # Fused bias (b_ih + b_hh), added exactly once in the hoisted projection.
    bias_p = jnp.zeros((1, h_pad), f32).at[0, :n_hidden].set(
        (b_ih + b_hh).astype(f32))
    wfc_p = jnp.zeros((h_pad, c_pad), f32).at[:n_hidden, :n_class].set(
        w_fc.T.astype(f32))
    bfc_p = jnp.zeros((1, c_pad), f32).at[0, :n_class].set(b_fc.astype(f32))

    return {
        "wih": wih_p, "whh": whh_p, "bias": bias_p, "wfc": wfc_p, "bfc": bfc_p,
        "n_class": n_class, "n_hidden": n_hidden, "c_pad": c_pad, "h_pad": h_pad,
    }


# --------------------------------------------------------------------------- #
# VMEM-budget-aware batch-tile selection
# --------------------------------------------------------------------------- #
def _per_tile_vmem_bytes(tb, seq_len, c_pad, h_pad):
    x_bytes = 2 * seq_len * tb * c_pad * 4          # X tile, double-buffered
    xw_bytes = seq_len * tb * h_pad * 4             # projection scratch
    out_bytes = 2 * tb * c_pad * 4                  # output tile
    h0_bytes = 2 * tb * h_pad * 4                   # h0 tile
    w_bytes = 2 * (c_pad * h_pad + h_pad * h_pad + h_pad * c_pad
                   + h_pad + c_pad) * 4             # resident weights + biases
    return x_bytes + xw_bytes + out_bytes + h0_bytes + w_bytes


def _choose_tb_and_vmem(b_pad, seq_len, c_pad, h_pad):
    try:
        vmem_cap = int(pltpu.get_tpu_info().vmem_capacity_bytes)
    except Exception:
        vmem_cap = 64 * 1024 * 1024                 # conservative (v7x per-TC)
    vmem_budget = (vmem_cap * 3) // 4

    tb = min(b_pad, 512)
    if b_pad >= 16:
        # Keep >= 2 grid steps so "parallel" can shard across 2 TCs (v7x);
        # costs at most one extra ~0.35us grid step on single-TC chips.
        tb = min(tb, _round_up(pl.cdiv(b_pad, 2), 8))
    while tb > 8 and _per_tile_vmem_bytes(tb, seq_len, c_pad, h_pad) > vmem_budget:
        tb -= 8
    tb = max(tb, 8)
    while b_pad % tb != 0:
        tb -= 8

    need = _per_tile_vmem_bytes(tb, seq_len, c_pad, h_pad)
    vmem_limit = int(min((vmem_cap * 7) // 8, max(2 * need, 32 * 1024 * 1024)))
    return tb, vmem_limit


# --------------------------------------------------------------------------- #
# Forward wrapper
# --------------------------------------------------------------------------- #
def textrnn_forward(hidden, X, padded):
    """hidden: [1, batch, n_hidden] (PyTorch convention), X: [batch, seq, n_class]."""
    batch, seq_len, n_class = X.shape
    n_hidden = padded["n_hidden"]
    c_pad, h_pad = padded["c_pad"], padded["h_pad"]
    f32 = jnp.float32

    b_pad = _round_up(max(batch, 8), 8)              # sublanes

    # Per-call padding: only X (transpose+pad fused into one scatter) and h0.
    x_p = jnp.zeros((seq_len, b_pad, c_pad), f32).at[:, :batch, :n_class].set(
        jnp.transpose(X, (1, 0, 2)).astype(f32))
    h0_p = jnp.zeros((b_pad, h_pad), f32).at[:batch, :n_hidden].set(
        hidden[0].astype(f32))

    tb, vmem_limit = _choose_tb_and_vmem(b_pad, seq_len, c_pad, h_pad)
    grid = (b_pad // tb,)

    kernel = functools.partial(textrnn_kernel,
                               seq_len=seq_len,
                               unroll=(seq_len <= 8))

    out_p = pl.pallas_call(
        kernel,
        out_shape=jax.ShapeDtypeStruct((b_pad, c_pad), f32),
        grid_spec=pltpu.PrefetchScalarGridSpec(
            num_scalar_prefetch=0,
            grid=grid,
            in_specs=[
                pl.BlockSpec((seq_len, tb, c_pad), lambda b: (0, b, 0)),  # X tile
                pl.BlockSpec((tb, h_pad), lambda b: (b, 0)),              # h0 tile
                pl.BlockSpec((c_pad, h_pad), lambda b: (0, 0)),           # W_ih^T (resident)
                pl.BlockSpec((h_pad, h_pad), lambda b: (0, 0)),           # W_hh^T (resident)
                pl.BlockSpec((1, h_pad), lambda b: (0, 0)),               # fused bias
                pl.BlockSpec((h_pad, c_pad), lambda b: (0, 0)),           # W_fc^T (resident)
                pl.BlockSpec((1, c_pad), lambda b: (0, 0)),               # fc bias
            ],
            out_specs=pl.BlockSpec((tb, c_pad), lambda b: (b, 0)),
            scratch_shapes=[pltpu.VMEM((seq_len, tb, h_pad), jnp.float32)],
        ),
        compiler_params=pltpu.CompilerParams(
            dimension_semantics=("parallel",),
            vmem_limit_bytes=vmem_limit,
        ),
    )(x_p, h0_p, padded["wih"], padded["whh"], padded["bias"],
      padded["wfc"], padded["bfc"])

    return out_p[:batch, :n_class]


# --------------------------------------------------------------------------- #
# Pure-JAX reference
# --------------------------------------------------------------------------- #
def reference_forward(hidden, X, params):
    w_ih, w_hh, b_ih, b_hh, w_fc, b_fc = params
    x_tm = jnp.transpose(X, (1, 0, 2))
    h = hidden[0]
    for t in range(x_tm.shape[0]):
        h = jnp.tanh(x_tm[t] @ w_ih.T + b_ih + h @ w_hh.T + b_hh)
    return h @ w_fc.T + b_fc


if __name__ == "__main__":
    # Problem sizes implied by the module's setup code.
    sentences = ['i like dog', 'i love coffee', 'i hate milk']
    word_list = ' '.join(sentences).split()
    vocab = sorted(set(word_list))                 # sorted -> deterministic
    word_idx = {w: i for i, w in enumerate(vocab)}
    n_class = len(vocab)                           # 7
    n_hidden = 5
    seq_len = 2
    batch = len(sentences)                         # 3

    # One-hot inputs: first two words of each sentence (as in the PyTorch script).
    X = jnp.zeros((batch, seq_len, n_class), jnp.float32)
    for b, sen in enumerate(sentences):
        for t, w in enumerate(sen.split()[:seq_len]):
            X = X.at[b, t, word_idx[w]].set(1.0)

    hidden = jnp.zeros((1, batch, n_hidden), jnp.float32)

    # Deterministic parameter init (PyTorch-style uniform(-1/sqrt(H), 1/sqrt(H))).
    key = jax.random.PRNGKey(0)
    ks = jax.random.split(key, 6)
    bound = 1.0 / jnp.sqrt(jnp.float32(n_hidden))
    u = lambda k, shape: jax.random.uniform(k, shape, jnp.float32, -bound, bound)
    params = (
        u(ks[0], (n_hidden, n_class)),   # rnn.weight_ih_l0
        u(ks[1], (n_hidden, n_hidden)),  # rnn.weight_hh_l0
        u(ks[2], (n_hidden,)),           # rnn.bias_ih_l0
        u(ks[3], (n_hidden,)),           # rnn.bias_hh_l0
        u(ks[4], (n_class, n_hidden)),   # fc.weight
        u(ks[5], (n_class,)),            # fc.bias
    )

    # Weights padded ONCE (parameter-load time), reused across forward calls.
    padded = pad_textrnn_params(params, n_class=n_class, n_hidden=n_hidden)

    out = jax.block_until_ready(textrnn_forward(hidden, X, padded))
    ref = reference_forward(hidden, X, params)
    assert out.shape == (batch, n_class)
    assert jnp.allclose(out, ref, atol=1e-5, rtol=1e-5)
    print("KERNEL_OK")
</pallas_src>

<mosaic_0001>
module attributes {stable_mosaic.version = 11 : i64} {
  func.func @textrnn_kernel(%arg0: i32, %arg1: memref<2x8x128xf32, #tpu.memory_space<vmem>>, %arg2: memref<8x128xf32, #tpu.memory_space<vmem>>, %arg3: memref<128x128xf32, #tpu.memory_space<vmem>>, %arg4: memref<128x128xf32, #tpu.memory_space<vmem>>, %arg5: memref<1x128xf32, #tpu.memory_space<vmem>>, %arg6: memref<128x128xf32, #tpu.memory_space<vmem>>, %arg7: memref<1x128xf32, #tpu.memory_space<vmem>>, %arg8: memref<8x128xf32, #tpu.memory_space<vmem>>, %arg9: memref<2x8x128xf32, #tpu.memory_space<vmem>>) attributes {dimension_semantics = [#tpu.dimension_semantics<parallel>], iteration_bounds = array<i64: 1>, scalar_prefetch = 0 : i64, scratch_operands = 1 : i64, tpu.core_type = #tpu.core_type<tc>, window_params = [{transform_indices = @transform_0, window_bounds = array<i64: 2, 8, 128>}, {transform_indices = @transform_1, window_bounds = array<i64: 8, 128>}, {pipeline_mode = #tpu.pipeline_mode<synchronous>, transform_indices = @transform_2, window_bounds = array<i64: 128, 128>}, {pipeline_mode = #tpu.pipeline_mode<synchronous>, transform_indices = @transform_3, window_bounds = array<i64: 128, 128>}, {pipeline_mode = #tpu.pipeline_mode<synchronous>, transform_indices = @transform_4, window_bounds = array<i64: 1, 128>}, {pipeline_mode = #tpu.pipeline_mode<synchronous>, transform_indices = @transform_5, window_bounds = array<i64: 128, 128>}, {pipeline_mode = #tpu.pipeline_mode<synchronous>, transform_indices = @transform_6, window_bounds = array<i64: 1, 128>}, {transform_indices = @transform_7, window_bounds = array<i64: 8, 128>}]} {
    %c0_i32 = arith.constant 0 : i32
    %c1_i32 = arith.constant 1 : i32
    %0 = arith.muli %c0_i32, %c1_i32 : i32
    %c0_i32_0 = arith.constant 0 : i32
    %1 = arith.addi %c0_i32_0, %0 : i32
    %2 = arith.index_cast %1 : i32 to index
    %c0 = arith.constant 0 : index
    %c0_1 = arith.constant 0 : index
    %3 = vector.load %arg1[%2, %c0, %c0_1] : memref<2x8x128xf32, #tpu.memory_space<vmem>>, vector<1x8x128xf32>
    %4 = vector.shape_cast %3 : vector<1x8x128xf32> to vector<8x128xf32>
    %c0_2 = arith.constant 0 : index
    %c0_3 = arith.constant 0 : index
    %5 = vector.load %arg3[%c0_2, %c0_3] : memref<128x128xf32, #tpu.memory_space<vmem>>, vector<128x128xf32>
    %cst = arith.constant dense<0.000000e+00> : vector<8x128xf32>
    %6 = tpu.matmul %4, %5, %cst {dimension_numbers = #tpu.dot_dimension_numbers<[1], [0], [0], [1], [0, 0, 1, 1], [], []>} : vector<8x128xf32>, vector<128x128xf32>, vector<8x128xf32> -> vector<8x128xf32>
    %c0_4 = arith.constant 0 : index
    %c0_5 = arith.constant 0 : index
    %7 = vector.load %arg5[%c0_4, %c0_5] : memref<1x128xf32, #tpu.memory_space<vmem>>, vector<1x128xf32>
    %8 = vector.broadcast %7 : vector<1x128xf32> to vector<8x128xf32>
    %9 = arith.addf %6, %8 : vector<8x128xf32>
    %10 = arith.index_cast %1 : i32 to index
    %c0_6 = arith.constant 0 : index
    %c0_7 = arith.constant 0 : index
    %11 = vector.load %arg9[%10, %c0_6, %c0_7] : memref<2x8x128xf32, #tpu.memory_space<vmem>>, vector<1x8x128xf32>
    %12 = vector.shape_cast %11 : vector<1x8x128xf32> to vector<8x128xf32>
    %13 = vector.shape_cast %9 : vector<8x128xf32> to vector<1x8x128xf32>
    tpu.vector_store %arg9[%10, %c0_6, %c0_7], %13 {strides = array<i32>} : memref<2x8x128xf32, #tpu.memory_space<vmem>>, vector<1x8x128xf32>,
    %c1_i32_8 = arith.constant 1 : i32
    %c1_i32_9 = arith.constant 1 : i32
    %14 = arith.muli %c1_i32_8, %c1_i32_9 : i32
    %c0_i32_10 = arith.constant 0 : i32
    %15 = arith.addi %c0_i32_10, %14 : i32
    %16 = arith.index_cast %15 : i32 to index
    %c0_11 = arith.constant 0 : index
    %c0_12 = arith.constant 0 : index
    %17 = vector.load %arg1[%16, %c0_11, %c0_12] : memref<2x8x128xf32, #tpu.memory_space<vmem>>, vector<1x8x128xf32>
    %18 = vector.shape_cast %17 : vector<1x8x128xf32> to vector<8x128xf32>
    %c0_13 = arith.constant 0 : index
    %c0_14 = arith.constant 0 : index
    %19 = vector.load %arg3[%c0_13, %c0_14] : memref<128x128xf32, #tpu.memory_space<vmem>>, vector<128x128xf32>
    %cst_15 = arith.constant dense<0.000000e+00> : vector<8x128xf32>
    %20 = tpu.matmul %18, %19, %cst_15 {dimension_numbers = #tpu.dot_dimension_numbers<[1], [0], [0], [1], [0, 0, 1, 1], [], []>} : vector<8x128xf32>, vector<128x128xf32>, vector<8x128xf32> -> vector<8x128xf32>
    %c0_16 = arith.constant 0 : index
    %c0_17 = arith.constant 0 : index
    %21 = vector.load %arg5[%c0_16, %c0_17] : memref<1x128xf32, #tpu.memory_space<vmem>>, vector<1x128xf32>
    %22 = vector.broadcast %21 : vector<1x128xf32> to vector<8x128xf32>
    %23 = arith.addf %20, %22 : vector<8x128xf32>
    %24 = arith.index_cast %15 : i32 to index
    %c0_18 = arith.constant 0 : index
    %c0_19 = arith.constant 0 : index
    %25 = vector.load %arg9[%24, %c0_18, %c0_19] : memref<2x8x128xf32, #tpu.memory_space<vmem>>, vector<1x8x128xf32>
    %26 = vector.shape_cast %25 : vector<1x8x128xf32> to vector<8x128xf32>
    %27 = vector.shape_cast %23 : vector<8x128xf32> to vector<1x8x128xf32>
    tpu.vector_store %arg9[%24, %c0_18, %c0_19], %27 {strides = array<i32>} : memref<2x8x128xf32, #tpu.memory_space<vmem>>, vector<1x8x128xf32>,
    %c2_i32 = arith.constant 2 : i32
    %c0_20 = arith.constant 0 : index
    %c0_21 = arith.constant 0 : index
    %28 = vector.load %arg2[%c0_20, %c0_21] : memref<8x128xf32, #tpu.memory_space<vmem>>, vector<8x128xf32>
    %c0_i32_22 = arith.constant 0 : i32
    %29 = arith.index_cast %c0_i32_22 : i32 to index
    %c0_23 = arith.constant 0 : index
    %c0_24 = arith.constant 0 : index
    %30 = vector.load %arg9[%29, %c0_23, %c0_24] : memref<2x8x128xf32, #tpu.memory_space<vmem>>, vector<1x8x128xf32>
    %31 = vector.shape_cast %30 : vector<1x8x128xf32> to vector<8x128xf32>
    %c0_25 = arith.constant 0 : index
    %c0_26 = arith.constant 0 : index
    %32 = vector.load %arg4[%c0_25, %c0_26] : memref<128x128xf32, #tpu.memory_space<vmem>>, vector<128x128xf32>
    %cst_27 = arith.constant dense<0.000000e+00> : vector<8x128xf32>
    %33 = tpu.matmul %28, %32, %cst_27 {dimension_numbers = #tpu.dot_dimension_numbers<[1], [0], [0], [1], [0, 0, 1, 1], [], []>} : vector<8x128xf32>, vector<128x128xf32>, vector<8x128xf32> -> vector<8x128xf32>
    %34 = arith.addf %31, %33 : vector<8x128xf32>
    %35 = math.tanh %34 : vector<8x128xf32>
    %c1_i32_28 = arith.constant 1 : i32
    %36 = arith.index_cast %c1_i32_28 : i32 to index
    %c0_29 = arith.constant 0 : index
    %c0_30 = arith.constant 0 : index
    %37 = vector.load %arg9[%36, %c0_29, %c0_30] : memref<2x8x128xf32, #tpu.memory_space<vmem>>, vector<1x8x128xf32>
    %38 = vector.shape_cast %37 : vector<1x8x128xf32> to vector<8x128xf32>
    %c0_31 = arith.constant 0 : index
    %c0_32 = arith.constant 0 : index
    %39 = vector.load %arg4[%c0_31, %c0_32] : memref<128x128xf32, #tpu.memory_space<vmem>>, vector<128x128xf32>
    %cst_33 = arith.constant dense<0.000000e+00> : vector<8x128xf32>
    %40 = tpu.matmul %35, %39, %cst_33 {dimension_numbers = #tpu.dot_dimension_numbers<[1], [0], [0], [1], [0, 0, 1, 1], [], []>} : vector<8x128xf32>, vector<128x128xf32>, vector<8x128xf32> -> vector<8x128xf32>
    %41 = arith.addf %38, %40 : vector<8x128xf32>
    %42 = math.tanh %41 : vector<8x128xf32>
    %c2_i32_34 = arith.constant 2 : i32
    %c0_35 = arith.constant 0 : index
    %c0_36 = arith.constant 0 : index
    %43 = vector.load %arg6[%c0_35, %c0_36] : memref<128x128xf32, #tpu.memory_space<vmem>>, vector<128x128xf32>
    %cst_37 = arith.constant dense<0.000000e+00> : vector<8x128xf32>
    %44 = tpu.matmul %42, %43, %cst_37 {dimension_numbers = #tpu.dot_dimension_numbers<[1], [0], [0], [1], [0, 0, 1, 1], [], []>} : vector<8x128xf32>, vector<128x128xf32>, vector<8x128xf32> -> vector<8x128xf32>
    %c0_38 = arith.constant 0 : index
    %c0_39 = arith.constant 0 : index
    %45 = vector.load %arg7[%c0_38, %c0_39] : memref<1x128xf32, #tpu.memory_space<vmem>>, vector<1x128xf32>
    %46 = vector.broadcast %45 : vector<1x128xf32> to vector<8x128xf32>
    %47 = arith.addf %44, %46 : vector<8x128xf32>
    %c0_40 = arith.constant 0 : index
    %c0_41 = arith.constant 0 : index
    %48 = vector.load %arg8[%c0_40, %c0_41] : memref<8x128xf32, #tpu.memory_space<vmem>>, vector<8x128xf32>
    tpu.vector_store %arg8[%c0_40, %c0_41], %47 {strides = array<i32>} : memref<8x128xf32, #tpu.memory_space<vmem>>, vector<8x128xf32>,
    return
  }
  func.func @transform_0(%arg0: i32) -> (i32, i32, i32) {
    %c0_i32 = arith.constant 0 : i32
    %c0_i32_0 = arith.constant 0 : i32
    %c0_i32_1 = arith.constant 0 : i32
    return %c0_i32, %arg0, %c0_i32_0 : i32, i32, i32
  }
  func.func @transform_1(%arg0: i32) -> (i32, i32) {
    %c0_i32 = arith.constant 0 : i32
    %c0_i32_0 = arith.constant 0 : i32
    return %arg0, %c0_i32 : i32, i32
  }
  func.func @transform_2(%arg0: i32) -> (i32, i32) {
    %c0_i32 = arith.constant 0 : i32
    %c0_i32_0 = arith.constant 0 : i32
    %c0_i32_1 = arith.constant 0 : i32
    return %c0_i32, %c0_i32_0 : i32, i32
  }
  func.func @transform_3(%arg0: i32) -> (i32, i32) {
    %c0_i32 = arith.constant 0 : i32
    %c0_i32_0 = arith.constant 0 : i32
    %c0_i32_1 = arith.constant 0 : i32
    return %c0_i32, %c0_i32_0 : i32, i32
  }
  func.func @transform_4(%arg0: i32) -> (i32, i32) {
    %c0_i32 = arith.constant 0 : i32
    %c0_i32_0 = arith.constant 0 : i32
    %c0_i32_1 = arith.constant 0 : i32
    return %c0_i32, %c0_i32_0 : i32, i32
  }
  func.func @transform_5(%arg0: i32) -> (i32, i32) {
    %c0_i32 = arith.constant 0 : i32
    %c0_i32_0 = arith.constant 0 : i32
    %c0_i32_1 = arith.constant 0 : i32
    return %c0_i32, %c0_i32_0 : i32, i32
  }
  func.func @transform_6(%arg0: i32) -> (i32, i32) {
    %c0_i32 = arith.constant 0 : i32
    %c0_i32_0 = arith.constant 0 : i32
    %c0_i32_1 = arith.constant 0 : i32
    return %c0_i32, %c0_i32_0 : i32, i32
  }
  func.func @transform_7(%arg0: i32) -> (i32, i32) {
    %c0_i32 = arith.constant 0 : i32
    %c0_i32_0 = arith.constant 0 : i32
    return %arg0, %c0_i32 : i32, i32
  }
}

</mosaic_0001>

<llo_original>
// kernel: tpu_custom_call.1
$region0: #{tpu_custom_call.1}
  #allocation0 [shape = 'u32[]', space=smem, size = 0x4, offset = 0x4, fixed_abs, tag = 'smem constant byte address 0x4 - core index']
  #allocation1 [shape = 'u32[144,128]{1,0:T(1,128)}', space=vmem, size = 0x12000, scoped, tag = 'internal scratch']
  #allocation2 [shape = 'f32[2,8,128]{2,1,0:T(8,128)}', space=vmem, size = 0x2000, scoped, tag = 'scratch operand']
  %s0 = inlined_call_operand.hbm [shape: f32[2,8,128], index: 0, kind: input, shape index: {}]
  %s1 = inlined_call_operand.hbm [shape: f32[8,128], index: 1, kind: input, shape index: {}]
  %s2 = inlined_call_operand.hbm [shape: f32[128,128], index: 2, kind: input, shape index: {}]
  %s3 = inlined_call_operand.hbm [shape: f32[128,128], index: 3, kind: input, shape index: {}]
  %s4 = inlined_call_operand.vmem [shape: f32[1,128], index: 4, kind: input, shape index: {}]
  %s5 = inlined_call_operand.hbm [shape: f32[128,128], index: 5, kind: input, shape index: {}]
  %s6 = inlined_call_operand.vmem [shape: f32[1,128], index: 6, kind: input, shape index: {}]
  %s7 = inlined_call_operand.hbm [shape: f32[8,128], index: 7, kind: output, shape index: {}]
  %s8 = sld [smem:[#allocation0]]
  $region58: #{tpu_custom_call.1} parent=0
    _
  %s10 = ssub.s32 1, %s8
  %s11 = scalar_select 0, %s10, %s8
  $region1: #{tpu_custom_call.1} parent=0
    #allocation3 [shape = 'u8[8192]{0}', space=vmem, size = 0x2000, scoped, tag = 'input window, operand 0, single buffered']
    #allocation4 [shape = 's32[1]{0}', space=sflag, size = 0x4, scoped, tag = 'scoped memory for tpu_custom_call.1']
    #allocation5 [shape = 's32[1]{0}', space=sflag, size = 0x4, scoped, tag = 'scoped memory for tpu_custom_call.1']
    #allocation6 [shape = 'u8[4096]{0}', space=vmem, size = 0x1000, scoped, tag = 'input window, operand 1, single buffered']
    #allocation7 [shape = 's32[1]{0}', space=sflag, size = 0x4, scoped, tag = 'scoped memory for tpu_custom_call.1']
    #allocation8 [shape = 'u8[65536]{0}', space=vmem, size = 0x10000, scoped, tag = 'input window, operand 2, single buffered']
    #allocation9 [shape = 'u8[65536]{0}', space=vmem, size = 0x10000, scoped, tag = 'input window, operand 3, single buffered']
    #allocation10 [shape = 's32[1]{0}', space=sflag, size = 0x4, scoped, tag = 'scoped memory for tpu_custom_call.1']
    #allocation11 [shape = 'u8[65536]{0}', space=vmem, size = 0x10000, scoped, tag = 'input window, operand 5, single buffered']
    #allocation12 [shape = 'u8[4096]{0}', space=vmem, size = 0x1000, scoped, tag = 'output window, operand 0, single buffered']
    %12 = vsyncpa [#allocation4], 0
    %13 = vsyncpa [#allocation7], 0
    %14 = vsyncpa [#allocation10], 0
    %15 = vsyncpa [#allocation5], 0
    // Predicated region
    $region2: #{tpu_custom_call.1} parent=1 // pred_check
      _
    $region3: #{tpu_custom_call.1} parent=1 // pred_check_branch
      %17 = sbr.rel (0) target = $region5
    $region4: #{tpu_custom_call.1} parent=1 // pred_region
      %s19 = ssub.s32 256, 256
      %20 = vsyncadd [#allocation4], %s19
      %s21 = sshll.u32 [#allocation3], 4
      %s22 = int_to_ptr.vmem [resolvable:$true] %s21
      %27 = dma.hbm_to_vmem [thread:$0]  %s0, 256, %s22, [#allocation4], 128, 128, 8
    $region5: #{tpu_custom_call.1} parent=1 // pred_fallthru
      _
    // Predicated region
    $region6: #{tpu_custom_call.1} parent=1 // pred_check
      _
    $region7: #{tpu_custom_call.1} parent=1 // pred_check_branch
      %29 = sbr.rel (0) target = $region9
    $region8: #{tpu_custom_call.1} parent=1 // pred_region
      %s31 = ssub.s32 128, 128
      %32 = vsyncadd [#allocation7], %s31
      %s34 = sshll.u32 [#allocation6], 4
      %s35 = int_to_ptr.vmem [resolvable:$true] %s34
      %37 = dma.hbm_to_vmem [thread:$0]  %s1, 128, %s35, [#allocation7]
    $region9: #{tpu_custom_call.1} parent=1 // pred_fallthru
      _
    // Predicated region
    $region10: #{tpu_custom_call.1} parent=1 // pred_check
      _
    $region11: #{tpu_custom_call.1} parent=1 // pred_check_branch
      %39 = sbr.rel (0) target = $region13
    $region12: #{tpu_custom_call.1} parent=1 // pred_region
      %s41 = ssub.s32 2048, 2048
      %42 = vsyncadd [#allocation7], %s41
      %s43 = sshll.u32 [#allocation8], 4
      %s44 = int_to_ptr.vmem [resolvable:$true] %s43
      %49 = dma.hbm_to_vmem [thread:$0]  %s2, 2048, %s44, [#allocation7], 128, 128, 8
    $region13: #{tpu_custom_call.1} parent=1 // pred_fallthru
      _
    // Predicated region
    $region14: #{tpu_custom_call.1} parent=1 // pred_check
      _
    $region15: #{tpu_custom_call.1} parent=1 // pred_check_branch
      %51 = sbr.rel (0) target = $region17
    $region16: #{tpu_custom_call.1} parent=1 // pred_region
      %s53 = ssub.s32 2048, 2048
      %54 = vsyncadd [#allocation10], %s53
      %s55 = sshll.u32 [#allocation9], 4
      %s56 = int_to_ptr.vmem [resolvable:$true] %s55
      %61 = dma.hbm_to_vmem [thread:$0]  %s3, 2048, %s56, [#allocation10], 128, 128, 8
    $region17: #{tpu_custom_call.1} parent=1 // pred_fallthru
      _
    // Predicated region
    $region18: #{tpu_custom_call.1} parent=1 // pred_check
      _
    $region19: #{tpu_custom_call.1} parent=1 // pred_check_branch
      %63 = sbr.rel (0) target = $region21
    $region20: #{tpu_custom_call.1} parent=1 // pred_region
      _
    $region21: #{tpu_custom_call.1} parent=1 // pred_fallthru
      _
    // Predicated region
    $region22: #{tpu_custom_call.1} parent=1 // pred_check
      _
    $region23: #{tpu_custom_call.1} parent=1 // pred_check_branch
      %65 = sbr.rel (0) target = $region25
    $region24: #{tpu_custom_call.1} parent=1 // pred_region
      %s67 = ssub.s32 2048, 2048
      %68 = vsyncadd [#allocation10], %s67
      %s69 = sshll.u32 [#allocation11], 4
      %s70 = int_to_ptr.vmem [resolvable:$true] %s69
      %75 = dma.hbm_to_vmem [thread:$0]  %s5, 2048, %s70, [#allocation10], 128, 128, 8
    $region25: #{tpu_custom_call.1} parent=1 // pred_fallthru
      _
    // Predicated region
    $region26: #{tpu_custom_call.1} parent=1 // pred_check
      _
    $region27: #{tpu_custom_call.1} parent=1 // pred_check_branch
      %77 = sbr.rel (0) target = $region29
    $region28: #{tpu_custom_call.1} parent=1 // pred_region
      _
    $region29: #{tpu_custom_call.1} parent=1 // pred_fallthru
      _
    // Predicated region
    $region30: #{tpu_custom_call.1} parent=1 // pred_check
      _
    $region31: #{tpu_custom_call.1} parent=1 // pred_check_branch
      %79 = sbr.rel (0) target = $region33
    $region32: #{tpu_custom_call.1} parent=1 // pred_region
      %80 = dma.done [#allocation4], 256
    $region33: #{tpu_custom_call.1} parent=1 // pred_fallthru
      _
    // Predicated region
    $region34: #{tpu_custom_call.1} parent=1 // pred_check
      _
    $region35: #{tpu_custom_call.1} parent=1 // pred_check_branch
      %82 = sbr.rel (0) target = $region37
    $region36: #{tpu_custom_call.1} parent=1 // pred_region
      %83 = dma.done [#allocation7], 128
    $region37: #{tpu_custom_call.1} parent=1 // pred_fallthru
      _
    // Predicated region
    $region38: #{tpu_custom_call.1} parent=1 // pred_check
      _
    $region39: #{tpu_custom_call.1} parent=1 // pred_check_branch
      %85 = sbr.rel (0) target = $region41
    $region40: #{tpu_custom_call.1} parent=1 // pred_region
      %86 = dma.done [#allocation7], 2048
    $region41: #{tpu_custom_call.1} parent=1 // pred_fallthru
      _
    // Predicated region
    $region42: #{tpu_custom_call.1} parent=1 // pred_check
      _
    $region43: #{tpu_custom_call.1} parent=1 // pred_check_branch
      %88 = sbr.rel (0) target = $region45
    $region44: #{tpu_custom_call.1} parent=1 // pred_region
      %89 = dma.done [#allocation10], 2048
    $region45: #{tpu_custom_call.1} parent=1 // pred_fallthru
      _
    // Predicated region
    $region46: #{tpu_custom_call.1} parent=1 // pred_check
      _
    $region47: #{tpu_custom_call.1} parent=1 // pred_check_branch
      %91 = sbr.rel (0) target = $region49
    $region48: #{tpu_custom_call.1} parent=1 // pred_region
      %92 = dma.done [#allocation10], 2048
    $region49: #{tpu_custom_call.1} parent=1 // pred_fallthru
      _
    %v93 = vld [vmem:[#allocation3] sm:$0xff]
    %v94 = vld [vmem:[#allocation8] sm:$0xff]
    %v95 = vld [vmem:[#allocation8 + $0x8] sm:$0xff]
    %v96 = vld [vmem:[#allocation8 + $0x10] sm:$0xff]
    %v97 = vld [vmem:[#allocation8 + $0x18] sm:$0xff]
    %v98 = vld [vmem:[#allocation8 + $0x20] sm:$0xff]
    %v99 = vld [vmem:[#allocation8 + $0x28] sm:$0xff]
    %v100 = vld [vmem:[#allocation8 + $0x30] sm:$0xff]
    %v101 = vld [vmem:[#allocation8 + $0x38] sm:$0xff]
    %v102 = vld [vmem:[#allocation8 + $0x40] sm:$0xff]
    %v103 = vld [vmem:[#allocation8 + $0x48] sm:$0xff]
    %v104 = vld [vmem:[#allocation8 + $0x50] sm:$0xff]
    %v105 = vld [vmem:[#allocation8 + $0x58] sm:$0xff]
    %v106 = vld [vmem:[#allocation8 + $0x60] sm:$0xff]
    %v107 = vld [vmem:[#allocation8 + $0x68] sm:$0xff]
    %v108 = vld [vmem:[#allocation8 + $0x70] sm:$0xff]
    %v109 = vld [vmem:[#allocation8 + $0x78] sm:$0xff]
    %v110 = vld [vmem:[%s4] sm:$0x1]
    %v112 = vlaneseq
    %v113 = vshrl.u32 %v112, 7
    %v114 = vsub.s32 0, %v113
    %v115 = vrot.slane %v110, %v114
    %117 = vmatprep.subr.mxu0 0.0
    %118 = vmatpush1.msra.mxu0 %v94
    %119 = vmatprep.subr.mxu0 0.0
    %120 = vmatpush1.msra.mxu0 %v95
    %121 = vmatprep.subr.mxu0 0.0
    %122 = vmatpush1.msra.mxu0 %v96
    %123 = vmatprep.subr.mxu0 0.0
    %124 = vmatpush1.msra.mxu0 %v97
    %125 = vmatprep.subr.mxu0 0.0
    %126 = vmatpush1.msra.mxu0 %v98
    %127 = vmatprep.subr.mxu0 0.0
    %128 = vmatpush1.msra.mxu0 %v99
    %129 = vmatprep.subr.mxu0 0.0
    %130 = vmatpush1.msra.mxu0 %v100
    %131 = vmatprep.subr.mxu0 0.0
    %132 = vmatpush1.msra.mxu0 %v101
    %133 = vmatprep.subr.mxu0 0.0
    %134 = vmatpush1.msra.mxu0 %v102
    %135 = vmatprep.subr.mxu0 0.0
    %136 = vmatpush1.msra.mxu0 %v103
    %137 = vmatprep.subr.mxu0 0.0
    %138 = vmatpush1.msra.mxu0 %v104
    %139 = vmatprep.subr.mxu0 0.0
    %140 = vmatpush1.msra.mxu0 %v105
    %141 = vmatprep.subr.mxu0 0.0
    %142 = vmatpush1.msra.mxu0 %v106
    %143 = vmatprep.subr.mxu0 0.0
    %144 = vmatpush1.msra.mxu0 %v107
    %145 = vmatprep.subr.mxu0 0.0
    %146 = vmatpush1.msra.mxu0 %v108
    %147 = vmatprep.subr.mxu0 0.0
    %148 = vmatpush1.msra.mxu0 %v109
    %149 = vmatprep.subr.mxu0 0.0
    %150 = vmatpush1.msra.mxu0 0.0
    %151 = vmatprep.subr.mxu0 0.0
    %152 = vmatpush1.msra.mxu0 0.0
    %153 = vmatprep.subr.mxu0 0.0
    %154 = vmatpush1.msra.mxu0 0.0
    %155 = vmatprep.subr.mxu0 0.0
    %156 = vmatpush1.msra.mxu0 0.0
    %157 = vmatprep.subr.mxu0 0.0
    %158 = vmatpush1.msra.mxu0 0.0
    %159 = vmatprep.subr.mxu0 0.0
    %160 = vmatpush1.msra.mxu0 0.0
    %161 = vmatprep.subr.mxu0 0.0
    %162 = vmatpush1.msra.mxu0 0.0
    %163 = vmatprep.subr.mxu0 0.0
    %164 = vmatpush1.msra.mxu0 0.0
    %165 = vmatprep.subr.mxu0 0.0
    %166 = vmatpush1.msra.mxu0 0.0
    %167 = vmatprep.subr.mxu0 0.0
    %168 = vmatpush1.msra.mxu0 0.0
    %169 = vmatprep.subr.mxu0 0.0
    %170 = vmatpush1.msra.mxu0 0.0
    %171 = vmatprep.subr.mxu0 0.0
    %172 = vmatpush1.msra.mxu0 0.0
    %173 = vmatprep.subr.mxu0 0.0
    %174 = vmatpush1.msra.mxu0 0.0
    %175 = vmatprep.subr.mxu0 0.0
    %176 = vmatpush1.msra.mxu0 0.0
    %177 = vmatprep.subr.mxu0 0.0
    %178 = vmatpush1.msra.mxu0 0.0
    %179 = vmatprep.subr.mxu0 0.0
    %180 = vmatpush1.msra.mxu0 0.0
    %181 = vmatprep.mubr.f32.mxu0 0.0
    %182 = vmatmul.mubr.f32.gmra.mrb[0].mxu0 %v93
    %v183 = vpop.f32.mrb[0].mxu0
    %v184 = vadd.f32 %v115, %v183
    %v185 = vpop.f32.mrb[0].mxu0
    %186 = vdwg.mxu0
    %187 = vst [vmem:[#allocation2] sm:$0xff] %v184
    %s188 = scalar_lea.vmem [#allocation3], 8
    %v189 = vld [vmem:[%s188] sm:$0xff]
    %v190 = vld [vmem:[#allocation8] sm:$0xff]
    %v191 = vld [vmem:[#allocation8 + $0x8] sm:$0xff]
    %v192 = vld [vmem:[#allocation8 + $0x10] sm:$0xff]
    %v193 = vld [vmem:[#allocation8 + $0x18] sm:$0xff]
    %v194 = vld [vmem:[#allocation8 + $0x20] sm:$0xff]
    %v195 = vld [vmem:[#allocation8 + $0x28] sm:$0xff]
    %v196 = vld [vmem:[#allocation8 + $0x30] sm:$0xff]
    %v197 = vld [vmem:[#allocation8 + $0x38] sm:$0xff]
    %v198 = vld [vmem:[#allocation8 + $0x40] sm:$0xff]
    %v199 = vld [vmem:[#allocation8 + $0x48] sm:$0xff]
    %v200 = vld [vmem:[#allocation8 + $0x50] sm:$0xff]
    %v201 = vld [vmem:[#allocation8 + $0x58] sm:$0xff]
    %v202 = vld [vmem:[#allocation8 + $0x60] sm:$0xff]
    %v203 = vld [vmem:[#allocation8 + $0x68] sm:$0xff]
    %v204 = vld [vmem:[#allocation8 + $0x70] sm:$0xff]
    %v205 = vld [vmem:[#allocation8 + $0x78] sm:$0xff]
    %v206 = vld [vmem:[%s4] sm:$0x1]
    %v208 = vlaneseq
    %v209 = vshrl.u32 %v208, 7
    %v210 = vsub.s32 0, %v209
    %v211 = vrot.slane %v206, %v210
    %213 = vmatprep.subr.mxu0 0.0
    %214 = vmatpush1.msra.mxu0 %v190
    %215 = vmatprep.subr.mxu0 0.0
    %216 = vmatpush1.msra.mxu0 %v191
    %217 = vmatprep.subr.mxu0 0.0
    %218 = vmatpush1.msra.mxu0 %v192
    %219 = vmatprep.subr.mxu0 0.0
    %220 = vmatpush1.msra.mxu0 %v193
    %221 = vmatprep.subr.mxu0 0.0
    %222 = vmatpush1.msra.mxu0 %v194
    %223 = vmatprep.subr.mxu0 0.0
    %224 = vmatpush1.msra.mxu0 %v195
    %225 = vmatprep.subr.mxu0 0.0
    %226 = vmatpush1.msra.mxu0 %v196
    %227 = vmatprep.subr.mxu0 0.0
    %228 = vmatpush1.msra.mxu0 %v197
    %229 = vmatprep.subr.mxu0 0.0
    %230 = vmatpush1.msra.mxu0 %v198
    %231 = vmatprep.subr.mxu0 0.0
    %232 = vmatpush1.msra.mxu0 %v199
    %233 = vmatprep.subr.mxu0 0.0
    %234 = vmatpush1.msra.mxu0 %v200
    %235 = vmatprep.subr.mxu0 0.0
    %236 = vmatpush1.msra.mxu0 %v201
    %237 = vmatprep.subr.mxu0 0.0
    %238 = vmatpush1.msra.mxu0 %v202
    %239 = vmatprep.subr.mxu0 0.0
    %240 = vmatpush1.msra.mxu0 %v203
    %241 = vmatprep.subr.mxu0 0.0
    %242 = vmatpush1.msra.mxu0 %v204
    %243 = vmatprep.subr.mxu0 0.0
    %244 = vmatpush1.msra.mxu0 %v205
    %245 = vmatprep.subr.mxu0 0.0
    %246 = vmatpush1.msra.mxu0 0.0
    %247 = vmatprep.subr.mxu0 0.0
    %248 = vmatpush1.msra.mxu0 0.0
    %249 = vmatprep.subr.mxu0 0.0
    %250 = vmatpush1.msra.mxu0 0.0
    %251 = vmatprep.subr.mxu0 0.0
    %252 = vmatpush1.msra.mxu0 0.0
    %253 = vmatprep.subr.mxu0 0.0
    %254 = vmatpush1.msra.mxu0 0.0
    %255 = vmatprep.subr.mxu0 0.0
    %256 = vmatpush1.msra.mxu0 0.0
    %257 = vmatprep.subr.mxu0 0.0
    %258 = vmatpush1.msra.mxu0 0.0
    %259 = vmatprep.subr.mxu0 0.0
    %260 = vmatpush1.msra.mxu0 0.0
    %261 = vmatprep.subr.mxu0 0.0
    %262 = vmatpush1.msra.mxu0 0.0
    %263 = vmatprep.subr.mxu0 0.0
    %264 = vmatpush1.msra.mxu0 0.0
    %265 = vmatprep.subr.mxu0 0.0
    %266 = vmatpush1.msra.mxu0 0.0
    %267 = vmatprep.subr.mxu0 0.0
    %268 = vmatpush1.msra.mxu0 0.0
    %269 = vmatprep.subr.mxu0 0.0
    %270 = vmatpush1.msra.mxu0 0.0
    %271 = vmatprep.subr.mxu0 0.0
    %272 = vmatpush1.msra.mxu0 0.0
    %273 = vmatprep.subr.mxu0 0.0
    %274 = vmatpush1.msra.mxu0 0.0
    %275 = vmatprep.subr.mxu0 0.0
    %276 = vmatpush1.msra.mxu0 0.0
    %277 = vmatprep.mubr.f32.mxu0 0.0
    %278 = vmatmul.mubr.f32.gmra.mrb[0].mxu0 %v189
    %v279 = vpop.f32.mrb[0].mxu0
    %v280 = vadd.f32 %v211, %v279
    %v281 = vpop.f32.mrb[0].mxu0
    %282 = vdwg.mxu0
    %s283 = scalar_lea.vmem [#allocation2], 8
    %284 = vst [vmem:[%s283] sm:$0xff] %v280
    %v285 = vld [vmem:[#allocation6] sm:$0xff]
    %v286 = vld [vmem:[#allocation2] sm:$0xff]
    %v287 = vld [vmem:[#allocation9] sm:$0xff]
    %v288 = vld [vmem:[#allocation9 + $0x8] sm:$0xff]
    %v289 = vld [vmem:[#allocation9 + $0x10] sm:$0xff]
    %v290 = vld [vmem:[#allocation9 + $0x18] sm:$0xff]
    %v291 = vld [vmem:[#allocation9 + $0x20] sm:$0xff]
    %v292 = vld [vmem:[#allocation9 + $0x28] sm:$0xff]
    %v293 = vld [vmem:[#allocation9 + $0x30] sm:$0xff]
    %v294 = vld [vmem:[#allocation9 + $0x38] sm:$0xff]
    %v295 = vld [vmem:[#allocation9 + $0x40] sm:$0xff]
    %v296 = vld [vmem:[#allocation9 + $0x48] sm:$0xff]
    %v297 = vld [vmem:[#allocation9 + $0x50] sm:$0xff]
    %v298 = vld [vmem:[#allocation9 + $0x58] sm:$0xff]
    %v299 = vld [vmem:[#allocation9 + $0x60] sm:$0xff]
    %v300 = vld [vmem:[#allocation9 + $0x68] sm:$0xff]
    %v301 = vld [vmem:[#allocation9 + $0x70] sm:$0xff]
    %v302 = vld [vmem:[#allocation9 + $0x78] sm:$0xff]
    %303 = vmatprep.subr.mxu0 0.0
    %304 = vmatpush1.msra.mxu0 %v287
    %305 = vmatprep.subr.mxu0 0.0
    %306 = vmatpush1.msra.mxu0 %v288
    %307 = vmatprep.subr.mxu0 0.0
    %308 = vmatpush1.msra.mxu0 %v289
    %309 = vmatprep.subr.mxu0 0.0
    %310 = vmatpush1.msra.mxu0 %v290
    %311 = vmatprep.subr.mxu0 0.0
    %312 = vmatpush1.msra.mxu0 %v291
    %313 = vmatprep.subr.mxu0 0.0
    %314 = vmatpush1.msra.mxu0 %v292
    %315 = vmatprep.subr.mxu0 0.0
    %316 = vmatpush1.msra.mxu0 %v293
    %317 = vmatprep.subr.mxu0 0.0
    %318 = vmatpush1.msra.mxu0 %v294
    %319 = vmatprep.subr.mxu0 0.0
    %320 = vmatpush1.msra.mxu0 %v295
    %321 = vmatprep.subr.mxu0 0.0
    %322 = vmatpush1.msra.mxu0 %v296
    %323 = vmatprep.subr.mxu0 0.0
    %324 = vmatpush1.msra.mxu0 %v297
    %325 = vmatprep.subr.mxu0 0.0
    %326 = vmatpush1.msra.mxu0 %v298
    %327 = vmatprep.subr.mxu0 0.0
    %328 = vmatpush1.msra.mxu0 %v299
    %329 = vmatprep.subr.mxu0 0.0
    %330 = vmatpush1.msra.mxu0 %v300
    %331 = vmatprep.subr.mxu0 0.0
    %332 = vmatpush1.msra.mxu0 %v301
    %333 = vmatprep.subr.mxu0 0.0
    %334 = vmatpush1.msra.mxu0 %v302
    %335 = vmatprep.subr.mxu0 0.0
    %336 = vmatpush1.msra.mxu0 0.0
    %337 = vmatprep.subr.mxu0 0.0
    %338 = vmatpush1.msra.mxu0 0.0
    %339 = vmatprep.subr.mxu0 0.0
    %340 = vmatpush1.msra.mxu0 0.0
    %341 = vmatprep.subr.mxu0 0.0
    %342 = vmatpush1.msra.mxu0 0.0
    %343 = vmatprep.subr.mxu0 0.0
    %344 = vmatpush1.msra.mxu0 0.0
    %345 = vmatprep.subr.mxu0 0.0
    %346 = vmatpush1.msra.mxu0 0.0
    %347 = vmatprep.subr.mxu0 0.0
    %348 = vmatpush1.msra.mxu0 0.0
    %349 = vmatprep.subr.mxu0 0.0
    %350 = vmatpush1.msra.mxu0 0.0
    %351 = vmatprep.subr.mxu0 0.0
    %352 = vmatpush1.msra.mxu0 0.0
    %353 = vmatprep.subr.mxu0 0.0
    %354 = vmatpush1.msra.mxu0 0.0
    %355 = vmatprep.subr.mxu0 0.0
    %356 = vmatpush1.msra.mxu0 0.0
    %357 = vmatprep.subr.mxu0 0.0
    %358 = vmatpush1.msra.mxu0 0.0
    %359 = vmatprep.subr.mxu0 0.0
    %360 = vmatpush1.msra.mxu0 0.0
    %361 = vmatprep.subr.mxu0 0.0
    %362 = vmatpush1.msra.mxu0 0.0
    %363 = vmatprep.subr.mxu0 0.0
    %364 = vmatpush1.msra.mxu0 0.0
    %365 = vmatprep.subr.mxu0 0.0
    %366 = vmatpush1.msra.mxu0 0.0
    %367 = vmatprep.mubr.f32.mxu0 0.0
    %368 = vmatmul.mubr.f32.gmra.mrb[0].mxu0 %v285
    %v369 = vpop.f32.mrb[0].mxu0
    %v370 = vadd.f32 0.0, %v369
    %v371 = vpop.f32.mrb[0].mxu0
    %372 = vdwg.mxu0
    %v373 = vadd.f32 %v286, %v370
    %v374 = vtanh.pop %v373
    %v375 = vld [vmem:[%s283] sm:$0xff]
    %376 = vmatprep.subr.mxu0 0.0
    %377 = vmatpush1.msra.mxu0 %v287
    %378 = vmatprep.subr.mxu0 0.0
    %379 = vmatpush1.msra.mxu0 %v288
    %380 = vmatprep.subr.mxu0 0.0
    %381 = vmatpush1.msra.mxu0 %v289
    %382 = vmatprep.subr.mxu0 0.0
    %383 = vmatpush1.msra.mxu0 %v290
    %384 = vmatprep.subr.mxu0 0.0
    %385 = vmatpush1.msra.mxu0 %v291
    %386 = vmatprep.subr.mxu0 0.0
    %387 = vmatpush1.msra.mxu0 %v292
    %388 = vmatprep.subr.mxu0 0.0
    %389 = vmatpush1.msra.mxu0 %v293
    %390 = vmatprep.subr.mxu0 0.0
    %391 = vmatpush1.msra.mxu0 %v294
    %392 = vmatprep.subr.mxu0 0.0
    %393 = vmatpush1.msra.mxu0 %v295
    %394 = vmatprep.subr.mxu0 0.0
    %395 = vmatpush1.msra.mxu0 %v296
    %396 = vmatprep.subr.mxu0 0.0
    %397 = vmatpush1.msra.mxu0 %v297
    %398 = vmatprep.subr.mxu0 0.0
    %399 = vmatpush1.msra.mxu0 %v298
    %400 = vmatprep.subr.mxu0 0.0
    %401 = vmatpush1.msra.mxu0 %v299
    %402 = vmatprep.subr.mxu0 0.0
    %403 = vmatpush1.msra.mxu0 %v300
    %404 = vmatprep.subr.mxu0 0.0
    %405 = vmatpush1.msra.mxu0 %v301
    %406 = vmatprep.subr.mxu0 0.0
    %407 = vmatpush1.msra.mxu0 %v302
    %408 = vmatprep.subr.mxu0 0.0
    %409 = vmatpush1.msra.mxu0 0.0
    %410 = vmatprep.subr.mxu0 0.0
    %411 = vmatpush1.msra.mxu0 0.0
    %412 = vmatprep.subr.mxu0 0.0
    %413 = vmatpush1.msra.mxu0 0.0
    %414 = vmatprep.subr.mxu0 0.0
    %415 = vmatpush1.msra.mxu0 0.0
    %416 = vmatprep.subr.mxu0 0.0
    %417 = vmatpush1.msra.mxu0 0.0
    %418 = vmatprep.subr.mxu0 0.0
    %419 = vmatpush1.msra.mxu0 0.0
    %420 = vmatprep.subr.mxu0 0.0
    %421 = vmatpush1.msra.mxu0 0.0
    %422 = vmatprep.subr.mxu0 0.0
    %423 = vmatpush1.msra.mxu0 0.0
    %424 = vmatprep.subr.mxu0 0.0
    %425 = vmatpush1.msra.mxu0 0.0
    %426 = vmatprep.subr.mxu0 0.0
    %427 = vmatpush1.msra.mxu0 0.0
    %428 = vmatprep.subr.mxu0 0.0
    %429 = vmatpush1.msra.mxu0 0.0
    %430 = vmatprep.subr.mxu0 0.0
    %431 = vmatpush1.msra.mxu0 0.0
    %432 = vmatprep.subr.mxu0 0.0
    %433 = vmatpush1.msra.mxu0 0.0
    %434 = vmatprep.subr.mxu0 0.0
    %435 = vmatpush1.msra.mxu0 0.0
    %436 = vmatprep.subr.mxu0 0.0
    %437 = vmatpush1.msra.mxu0 0.0
    %438 = vmatprep.subr.mxu0 0.0
    %439 = vmatpush1.msra.mxu0 0.0
    %440 = vmatprep.mubr.f32.mxu0 0.0
    %441 = vmatmul.mubr.f32.gmra.mrb[0].mxu0 %v374
    %v442 = vpop.f32.mrb[0].mxu0
    %v443 = vadd.f32 0.0, %v442
    %v444 = vpop.f32.mrb[0].mxu0
    %445 = vdwg.mxu0
    %v446 = vadd.f32 %v375, %v443
    %v447 = vtanh.pop %v446
    %v448 = vld [vmem:[#allocation11] sm:$0xff]
    %v449 = vld [vmem:[#allocation11 + $0x8] sm:$0xff]
    %v450 = vld [vmem:[#allocation11 + $0x10] sm:$0xff]
    %v451 = vld [vmem:[#allocation11 + $0x18] sm:$0xff]
    %v452 = vld [vmem:[#allocation11 + $0x20] sm:$0xff]
    %v453 = vld [vmem:[#allocation11 + $0x28] sm:$0xff]
    %v454 = vld [vmem:[#allocation11 + $0x30] sm:$0xff]
    %v455 = vld [vmem:[#allocation11 + $0x38] sm:$0xff]
    %v456 = vld [vmem:[#allocation11 + $0x40] sm:$0xff]
    %v457 = vld [vmem:[#allocation11 + $0x48] sm:$0xff]
    %v458 = vld [vmem:[#allocation11 + $0x50] sm:$0xff]
    %v459 = vld [vmem:[#allocation11 + $0x58] sm:$0xff]
    %v460 = vld [vmem:[#allocation11 + $0x60] sm:$0xff]
    %v461 = vld [vmem:[#allocation11 + $0x68] sm:$0xff]
    %v462 = vld [vmem:[#allocation11 + $0x70] sm:$0xff]
    %v463 = vld [vmem:[#allocation11 + $0x78] sm:$0xff]
    %v464 = vld [vmem:[%s6] sm:$0x1]
    %v466 = vlaneseq
    %v467 = vshrl.u32 %v466, 7
    %v468 = vsub.s32 0, %v467
    %v469 = vrot.slane %v464, %v468
    %471 = vmatprep.subr.mxu0 0.0
    %472 = vmatpush1.msra.mxu0 %v448
    %473 = vmatprep.subr.mxu0 0.0
    %474 = vmatpush1.msra.mxu0 %v449
    %475 = vmatprep.subr.mxu0 0.0
    %476 = vmatpush1.msra.mxu0 %v450
    %477 = vmatprep.subr.mxu0 0.0
    %478 = vmatpush1.msra.mxu0 %v451
    %479 = vmatprep.subr.mxu0 0.0
    %480 = vmatpush1.msra.mxu0 %v452
    %481 = vmatprep.subr.mxu0 0.0
    %482 = vmatpush1.msra.mxu0 %v453
    %483 = vmatprep.subr.mxu0 0.0
    %484 = vmatpush1.msra.mxu0 %v454
    %485 = vmatprep.subr.mxu0 0.0
    %486 = vmatpush1.msra.mxu0 %v455
    %487 = vmatprep.subr.mxu0 0.0
    %488 = vmatpush1.msra.mxu0 %v456
    %489 = vmatprep.subr.mxu0 0.0
    %490 = vmatpush1.msra.mxu0 %v457
    %491 = vmatprep.subr.mxu0 0.0
    %492 = vmatpush1.msra.mxu0 %v458
    %493 = vmatprep.subr.mxu0 0.0
    %494 = vmatpush1.msra.mxu0 %v459
    %495 = vmatprep.subr.mxu0 0.0
    %496 = vmatpush1.msra.mxu0 %v460
    %497 = vmatprep.subr.mxu0 0.0
    %498 = vmatpush1.msra.mxu0 %v461
    %499 = vmatprep.subr.mxu0 0.0
    %500 = vmatpush1.msra.mxu0 %v462
    %501 = vmatprep.subr.mxu0 0.0
    %502 = vmatpush1.msra.mxu0 %v463
    %503 = vmatprep.subr.mxu0 0.0
    %504 = vmatpush1.msra.mxu0 0.0
    %505 = vmatprep.subr.mxu0 0.0
    %506 = vmatpush1.msra.mxu0 0.0
    %507 = vmatprep.subr.mxu0 0.0
    %508 = vmatpush1.msra.mxu0 0.0
    %509 = vmatprep.subr.mxu0 0.0
    %510 = vmatpush1.msra.mxu0 0.0
    %511 = vmatprep.subr.mxu0 0.0
    %512 = vmatpush1.msra.mxu0 0.0
    %513 = vmatprep.subr.mxu0 0.0
    %514 = vmatpush1.msra.mxu0 0.0
    %515 = vmatprep.subr.mxu0 0.0
    %516 = vmatpush1.msra.mxu0 0.0
    %517 = vmatprep.subr.mxu0 0.0
    %518 = vmatpush1.msra.mxu0 0.0
    %519 = vmatprep.subr.mxu0 0.0
    %520 = vmatpush1.msra.mxu0 0.0
    %521 = vmatprep.subr.mxu0 0.0
    %522 = vmatpush1.msra.mxu0 0.0
    %523 = vmatprep.subr.mxu0 0.0
    %524 = vmatpush1.msra.mxu0 0.0
    %525 = vmatprep.subr.mxu0 0.0
    %526 = vmatpush1.msra.mxu0 0.0
    %527 = vmatprep.subr.mxu0 0.0
    %528 = vmatpush1.msra.mxu0 0.0
    %529 = vmatprep.subr.mxu0 0.0
    %530 = vmatpush1.msra.mxu0 0.0
    %531 = vmatprep.subr.mxu0 0.0
    %532 = vmatpush1.msra.mxu0 0.0
    %533 = vmatprep.subr.mxu0 0.0
    %534 = vmatpush1.msra.mxu0 0.0
    %535 = vmatprep.mubr.f32.mxu0 0.0
    %536 = vmatmul.mubr.f32.gmra.mrb[0].mxu0 %v447
    %v537 = vpop.f32.mrb[0].mxu0
    %v538 = vadd.f32 %v469, %v537
    %v539 = vpop.f32.mrb[0].mxu0
    %540 = vdwg.mxu0
    %541 = vst [vmem:[#allocation12] sm:$0xff] %v538
    // Predicated region
    $region50: #{tpu_custom_call.1} parent=1 // pred_check
      _
    $region51: #{tpu_custom_call.1} parent=1 // pred_check_branch
      %543 = sbr.rel (0) target = $region53
    $region52: #{tpu_custom_call.1} parent=1 // pred_region
      %s545 = ssub.s32 128, 128
      %546 = vsyncadd [#allocation5], %s545
      %s548 = sshll.u32 [#allocation12], 4
      %s549 = int_to_ptr.vmem [resolvable:$true] %s548
      %551 = dma.vmem_to_hbm [thread:$0]  %s549, 128, %s7, [#allocation5]
    $region53: #{tpu_custom_call.1} parent=1 // pred_fallthru
      _
    // Predicated region
    $region54: #{tpu_custom_call.1} parent=1 // pred_check
      _
    $region55: #{tpu_custom_call.1} parent=1 // pred_check_branch
      %553 = sbr.rel (0) target = $region57
    $region56: #{tpu_custom_call.1} parent=1 // pred_region
      %554 = dma.done [#allocation5], 128
    $region57: #{tpu_custom_call.1} parent=1 // pred_fallthru
      _
    %555 = vsyncpa [#allocation4], 1
    %556 = vsyncpa [#allocation7], 1
    %557 = vsyncpa [#allocation10], 1
    %558 = vsyncpa [#allocation5], 1

</llo_original>
